<compile_context>
chip_gen: v7x
topology: tpu7x:2x2x1
jax: 0.10.0
libtpu: 0.0.40
codegen_flags: <defaults>
</compile_context>

<pallas_src>
import functools

import jax
import jax.numpy as jnp
from jax import lax
from jax.experimental import pallas as pl
from jax.experimental.pallas import tpu as pltpu

LANES = 128
SUBLANES = 8
DEFAULT_TILE_ROWS = 1024  # 1024 x 128 x 4B = 512 KiB per f32 input buffer


def _smape_partial_kernel(pred_ref, gt_ref, part_ref, *, rows, tile_m, needs_mask):
    p = pred_ref[...].astype(jnp.float32)
    g = gt_ref[...].astype(jnp.float32)
    loss = jnp.abs(p - g) / (jnp.abs(p) + jnp.abs(g) + jnp.float32(0.01))

    if needs_mask:
        # Zero rows past the true row count: the last (partial) tile's DMA is
        # clamped by Pallas and the tail of the VMEM block is unspecified.
        row0 = pl.program_id(0) * tile_m
        row_ids = row0 + lax.broadcasted_iota(jnp.int32, (tile_m, LANES), 0)
        loss = jnp.where(row_ids < rows, loss, jnp.float32(0.0))

    # Fold (tile_m, 128) -> (8, 128) with sublane/lane-parallel VPU adds.
    # The single cross-lane collapse happens once, in the wrapper, over the
    # tiny (num_tiles, 8, 128) output.
    partial = loss.reshape(tile_m // SUBLANES, SUBLANES, LANES).sum(axis=0)
    part_ref[...] = partial.reshape(1, SUBLANES, LANES)


def smape_loss(pred, gt, *, tile_rows=DEFAULT_TILE_ROWS):
    assert pred.shape == gt.shape, "pred/gt must have the same shape"
    n = pred.size  # true element count for the mean

    # Flatten (free for contiguous inputs); keep the original dtype in HBM.
    pf = jnp.ravel(pred)
    gf = jnp.ravel(gt)

    # Minimal zero-pad so the lane-dense (rows, 128) reshape is legal and
    # rows >= 8. Zero padding contributes 0 to the SMAPE sum. This is a no-op
    # for aligned sizes (e.g. the common n % 1024 == 0 image-tensor case).
    padded_n = max(((n + LANES - 1) // LANES) * LANES, SUBLANES * LANES)
    rem = padded_n - n
    if rem:
        pf = jnp.pad(pf, (0, rem))
        gf = jnp.pad(gf, (0, rem))
    rows = padded_n // LANES
    pf = pf.reshape(rows, LANES)
    gf = gf.reshape(rows, LANES)

    # Row tile: sublane-aligned, never larger than the array, capped at
    # tile_rows. The last grid step may cover a partial block (masked above).
    tile_m = min(int(tile_rows), (rows // SUBLANES) * SUBLANES)
    num_tiles = pl.cdiv(rows, tile_m)
    needs_mask = (num_tiles * tile_m != rows)

    kernel = functools.partial(
        _smape_partial_kernel, rows=rows, tile_m=tile_m, needs_mask=needs_mask
    )

    partials = pl.pallas_call(
        kernel,
        out_shape=jax.ShapeDtypeStruct((num_tiles, SUBLANES, LANES), jnp.float32),
        grid_spec=pltpu.PrefetchScalarGridSpec(
            num_scalar_prefetch=0,
            grid=(num_tiles,),
            in_specs=[
                pl.BlockSpec((tile_m, LANES), lambda i: (i, 0)),
                pl.BlockSpec((tile_m, LANES), lambda i: (i, 0)),
            ],
            out_specs=pl.BlockSpec((1, SUBLANES, LANES), lambda i: (i, 0, 0)),
        ),
        compiler_params=pltpu.CompilerParams(
            dimension_semantics=("parallel",),
        ),
    )(pf, gf)

    return (jnp.sum(partials) / jnp.float32(n)).astype(jnp.float32)


if __name__ == "__main__":
    key = jax.random.PRNGKey(0)
    k1, k2, k3, k4 = jax.random.split(key, 4)

    def _ref(p, g):
        return jnp.mean(jnp.abs(p - g) / (jnp.abs(p) + jnp.abs(g) + 0.01))

    # NCHW-shaped inputs consistent with an image loss (aligned path).
    pred = jax.random.normal(k1, (2, 4, 16, 16), dtype=jnp.float32)
    gt = jax.random.normal(k2, (2, 4, 16, 16), dtype=jnp.float32)
    out = smape_loss(pred, gt)
    jax.block_until_ready(out)
    assert jnp.allclose(out, _ref(pred, gt), rtol=1e-5, atol=1e-6), (
        out, _ref(pred, gt))

    # Ragged shape exercising the pad-to-128 + in-kernel tail-mask path.
    pred2 = jax.random.normal(k3, (2, 3, 15, 15), dtype=jnp.float32)
    gt2 = jax.random.normal(k4, (2, 3, 15, 15), dtype=jnp.float32)
    out2 = smape_loss(pred2, gt2)
    jax.block_until_ready(out2)
    assert jnp.allclose(out2, _ref(pred2, gt2), rtol=1e-5, atol=1e-6), (
        out2, _ref(pred2, gt2))

    print("KERNEL_OK")
</pallas_src>

<mosaic_0001>
module attributes {stable_mosaic.version = 11 : i64} {
  func.func @_smape_partial_kernel(%arg0: i32, %arg1: memref<16x128xf32, #tpu.memory_space<vmem>>, %arg2: memref<16x128xf32, #tpu.memory_space<vmem>>, %arg3: memref<1x8x128xf32, #tpu.memory_space<vmem>>) attributes {dimension_semantics = [#tpu.dimension_semantics<parallel>], iteration_bounds = array<i64: 1>, scalar_prefetch = 0 : i64, scratch_operands = 0 : i64, tpu.core_type = #tpu.core_type<tc>, window_params = [{transform_indices = @transform_0, window_bounds = array<i64: 16, 128>}, {transform_indices = @transform_1, window_bounds = array<i64: 16, 128>}, {transform_indices = @transform_2, window_bounds = array<i64: 1, 8, 128>}]} {
    %c0 = arith.constant 0 : index
    %c0_0 = arith.constant 0 : index
    %0 = vector.load %arg1[%c0, %c0_0] : memref<16x128xf32, #tpu.memory_space<vmem>>, vector<16x128xf32>
    %c0_1 = arith.constant 0 : index
    %c0_2 = arith.constant 0 : index
    %1 = vector.load %arg2[%c0_1, %c0_2] : memref<16x128xf32, #tpu.memory_space<vmem>>, vector<16x128xf32>
    %2 = arith.subf %0, %1 : vector<16x128xf32>
    %3 = math.absf %2 : vector<16x128xf32>
    %4 = math.absf %0 : vector<16x128xf32>
    %5 = math.absf %1 : vector<16x128xf32>
    %6 = arith.addf %4, %5 : vector<16x128xf32>
    %cst = arith.constant 0.00999999977 : f32
    %7 = vector.broadcast %cst : f32 to vector<16x128xf32>
    %8 = arith.addf %6, %7 : vector<16x128xf32>
    %9 = arith.divf %3, %8 : vector<16x128xf32>
    %10 = vector.shape_cast %9 : vector<16x128xf32> to vector<2x8x128xf32>
    %cst_3 = arith.constant dense<0.000000e+00> : vector<8x128xf32>
    %11 = vector.multi_reduction <add>, %10, %cst_3 [0] : vector<2x8x128xf32> to vector<8x128xf32>
    %12 = vector.shape_cast %11 : vector<8x128xf32> to vector<1x8x128xf32>
    %c0_4 = arith.constant 0 : index
    %c0_5 = arith.constant 0 : index
    %c0_6 = arith.constant 0 : index
    %13 = vector.load %arg3[%c0_4, %c0_5, %c0_6] : memref<1x8x128xf32, #tpu.memory_space<vmem>>, vector<1x8x128xf32>
    tpu.vector_store %arg3[%c0_4, %c0_5, %c0_6], %12 {strides = array<i32>} : memref<1x8x128xf32, #tpu.memory_space<vmem>>, vector<1x8x128xf32>,
    return
  }
  func.func @transform_0(%arg0: i32) -> (i32, i32) {
    %c0_i32 = arith.constant 0 : i32
    %c0_i32_0 = arith.constant 0 : i32
    return %arg0, %c0_i32 : i32, i32
  }
  func.func @transform_1(%arg0: i32) -> (i32, i32) {
    %c0_i32 = arith.constant 0 : i32
    %c0_i32_0 = arith.constant 0 : i32
    return %arg0, %c0_i32 : i32, i32
  }
  func.func @transform_2(%arg0: i32) -> (i32, i32, i32) {
    %c0_i32 = arith.constant 0 : i32
    %c0_i32_0 = arith.constant 0 : i32
    %c0_i32_1 = arith.constant 0 : i32
    return %arg0, %c0_i32, %c0_i32_0 : i32, i32, i32
  }
}

</mosaic_0001>

<llo_original>
// kernel: tpu_custom_call.1
$region0: #{tpu_custom_call.1}
  #allocation0 [shape = 'u32[]', space=smem, size = 0x4, offset = 0x4, fixed_abs, tag = 'smem constant byte address 0x4 - core index']
  #allocation1 [shape = 'u32[144,128]{1,0:T(1,128)}', space=vmem, size = 0x12000, scoped, tag = 'internal scratch']
  %s0 = inlined_call_operand.hbm [shape: f32[16,128], index: 0, kind: input, shape index: {}]
  %s1 = inlined_call_operand.hbm [shape: f32[16,128], index: 1, kind: input, shape index: {}]
  %s2 = inlined_call_operand.hbm [shape: f32[1,8,128], index: 2, kind: output, shape index: {}]
  %s3 = sld [smem:[#allocation0]]
  $region26: #{tpu_custom_call.1} parent=0
    _
  %s5 = ssub.s32 1, %s3
  %s6 = scalar_select 0, %s5, %s3
  $region1: #{tpu_custom_call.1} parent=0
    #allocation2 [shape = 'u8[8192]{0}', space=vmem, size = 0x2000, scoped, tag = 'input window, operand 0, single buffered']
    #allocation3 [shape = 's32[1]{0}', space=sflag, size = 0x4, scoped, tag = 'scoped memory for tpu_custom_call.1']
    #allocation4 [shape = 's32[1]{0}', space=sflag, size = 0x4, scoped, tag = 'scoped memory for tpu_custom_call.1']
    #allocation5 [shape = 'u8[8192]{0}', space=vmem, size = 0x2000, scoped, tag = 'input window, operand 1, single buffered']
    #allocation6 [shape = 's32[1]{0}', space=sflag, size = 0x4, scoped, tag = 'scoped memory for tpu_custom_call.1']
    #allocation7 [shape = 'u8[4096]{0}', space=vmem, size = 0x1000, scoped, tag = 'output window, operand 0, single buffered']
    %7 = vsyncpa [#allocation3], 0
    %8 = vsyncpa [#allocation6], 0
    %9 = vsyncpa [#allocation4], 0
    // Predicated region
    $region2: #{tpu_custom_call.1} parent=1 // pred_check
      _
    $region3: #{tpu_custom_call.1} parent=1 // pred_check_branch
      %11 = sbr.rel (0) target = $region5
    $region4: #{tpu_custom_call.1} parent=1 // pred_region
      %s13 = ssub.s32 256, 256
      %14 = vsyncadd [#allocation3], %s13
      %s15 = sshll.u32 [#allocation2], 4
      %s16 = int_to_ptr.vmem [resolvable:$true] %s15
      %21 = dma.hbm_to_vmem [thread:$0]  %s0, 256, %s16, [#allocation3], 128, 128, 8
    $region5: #{tpu_custom_call.1} parent=1 // pred_fallthru
      _
    // Predicated region
    $region6: #{tpu_custom_call.1} parent=1 // pred_check
      _
    $region7: #{tpu_custom_call.1} parent=1 // pred_check_branch
      %23 = sbr.rel (0) target = $region9
    $region8: #{tpu_custom_call.1} parent=1 // pred_region
      %s25 = ssub.s32 256, 256
      %26 = vsyncadd [#allocation6], %s25
      %s27 = sshll.u32 [#allocation5], 4
      %s28 = int_to_ptr.vmem [resolvable:$true] %s27
      %33 = dma.hbm_to_vmem [thread:$0]  %s1, 256, %s28, [#allocation6], 128, 128, 8
    $region9: #{tpu_custom_call.1} parent=1 // pred_fallthru
      _
    // Predicated region
    $region10: #{tpu_custom_call.1} parent=1 // pred_check
      _
    $region11: #{tpu_custom_call.1} parent=1 // pred_check_branch
      %35 = sbr.rel (0) target = $region13
    $region12: #{tpu_custom_call.1} parent=1 // pred_region
      %36 = dma.done [#allocation3], 256
    $region13: #{tpu_custom_call.1} parent=1 // pred_fallthru
      _
    // Predicated region
    $region14: #{tpu_custom_call.1} parent=1 // pred_check
      _
    $region15: #{tpu_custom_call.1} parent=1 // pred_check_branch
      %38 = sbr.rel (0) target = $region17
    $region16: #{tpu_custom_call.1} parent=1 // pred_region
      %39 = dma.done [#allocation6], 256
    $region17: #{tpu_custom_call.1} parent=1 // pred_fallthru
      _
    %v40 = vld [vmem:[#allocation2] sm:$0xff]
    %v41 = vld [vmem:[#allocation2 + $0x8] sm:$0xff]
    %v42 = vld [vmem:[#allocation5] sm:$0xff]
    %v43 = vld [vmem:[#allocation5 + $0x8] sm:$0xff]
    %v44 = vsub.f32 %v40, %v42
    %v45 = vsub.f32 %v41, %v43
    %v46 = vand.u32 2147483647, %v44
    %v47 = vand.u32 2147483647, %v45
    %v48 = vand.u32 2147483647, %v40
    %v49 = vand.u32 2147483647, %v41
    %v50 = vand.u32 2147483647, %v42
    %v51 = vand.u32 2147483647, %v43
    %v52 = vadd.f32 %v48, %v50
    %v53 = vadd.f32 %v49, %v51
    %v54 = vadd.f32 %v52, 0.01
    %v55 = vadd.f32 %v53, 0.01
    %v56 = vrcp.pop %v54
    %v57 = vmul.f32 %v46, %v56
    %v58 = vrcp.pop %v55
    %v59 = vmul.f32 %v47, %v58
    %v60 = vadd.f32 %v57, %v59
    %61 = vst [vmem:[#allocation7] sm:$0xff] %v60
    // Predicated region
    $region18: #{tpu_custom_call.1} parent=1 // pred_check
      _
    $region19: #{tpu_custom_call.1} parent=1 // pred_check_branch
      %63 = sbr.rel (0) target = $region21
    $region20: #{tpu_custom_call.1} parent=1 // pred_region
      %s65 = ssub.s32 128, 128
      %66 = vsyncadd [#allocation4], %s65
      %s68 = sshll.u32 [#allocation7], 4
      %s69 = int_to_ptr.vmem [resolvable:$true] %s68
      %71 = dma.vmem_to_hbm [thread:$0]  %s69, 128, %s2, [#allocation4]
    $region21: #{tpu_custom_call.1} parent=1 // pred_fallthru
      _
    // Predicated region
    $region22: #{tpu_custom_call.1} parent=1 // pred_check
      _
    $region23: #{tpu_custom_call.1} parent=1 // pred_check_branch
      %73 = sbr.rel (0) target = $region25
    $region24: #{tpu_custom_call.1} parent=1 // pred_region
      %74 = dma.done [#allocation4], 128
    $region25: #{tpu_custom_call.1} parent=1 // pred_fallthru
      _
    %75 = vsyncpa [#allocation3], 1
    %76 = vsyncpa [#allocation6], 1
    %77 = vsyncpa [#allocation4], 1

</llo_original>
